<compile_context>
chip_gen: v7x
topology: tpu7x:2x2x1
jax: 0.10.0
libtpu: 0.0.40
codegen_flags: <defaults>
</compile_context>

<pallas_src>
import jax
import jax.numpy as jnp
from jax.experimental import pallas as pl
from jax.experimental.pallas import tpu as pltpu


def _make_bottleneck_kernel(H, W, Cmid, Bblk):
    HW = H * W

    def kernel(x_ref, w1_ref, w2_ref, w3_ref, mask_ref, o_ref, slab_ref):
        # x_ref   : (Bblk, Cin, HW)   channels on sublanes, pixels on lanes
        # w1_ref  : (Cmid, Cin)       conv1 1x1  (out-ch x in-ch)
        # w2_ref  : (Cmid, 9*Cmid)    conv2 3x3 dil=2, im2col-reshaped
        # w3_ref  : (Cout, Cmid)      conv3 1x1
        # mask_ref: (9, HW)           {0,1} f32 boundary-validity masks
        # o_ref   : (Bblk, Cout, HW)
        # slab_ref: (9*Cmid, HW)      VMEM scratch for the im2col slab
        w1 = w1_ref[...]
        w2 = w2_ref[...]
        w3 = w3_ref[...]

        for bi in range(Bblk):  # short static loop; Bblk is tiny
            x = x_ref[bi].astype(jnp.float32)                       # (Cin, HW)

            # ---- conv1 (1x1) + ReLU: lane-dense channel matmul (MXU) ----
            t1 = jnp.maximum(
                jnp.dot(w1, x, preferred_element_type=jnp.float32), 0.0)

            # ---- conv2 (3x3, dilation=2, padding=2) as ONE fused matmul ----
            # Build the (9*Cmid, HW) im2col slab tap by tap: XLU lane-roll of
            # t1 + precomputed boundary mask, stored straight into VMEM
            # scratch so only one (Cmid, HW) tap is ever live in vregs.
            tap = 0
            for ky in range(3):
                for kx in range(3):
                    dy, dx = 2 * (ky - 1), 2 * (kx - 1)
                    s = dy * W + dx                                  # flat shift
                    if s == 0:
                        slab_ref[pl.ds(tap * Cmid, Cmid), :] = t1    # center tap
                    else:
                        # out[p] = t1[(p + s) % HW]; wrapped lanes are zeroed
                        # by the mask (p+s out of range => row/col invalid).
                        shifted = pltpu.roll(t1, shift=(-s) % HW, axis=1)
                        m = mask_ref[pl.ds(tap, 1), :]               # (1, HW)
                        slab_ref[pl.ds(tap * Cmid, Cmid), :] = shifted * m
                    tap += 1

            t2 = jnp.maximum(
                jnp.dot(w2, slab_ref[...], preferred_element_type=jnp.float32),
                0.0)

            # ---- conv3 (1x1): final matmul, no ReLU in forward ----
            out = jnp.dot(w3, t2, preferred_element_type=jnp.float32)
            o_ref[bi] = out.astype(o_ref.dtype)                      # lane-dense

    return kernel


def _boundary_masks(H, W):
    """(9, H*W) {0,1} f32 masks, tap order ky*3+kx, dilation 2."""
    HW = H * W
    pix = jnp.arange(HW, dtype=jnp.int32)
    row = pix // W
    col = pix - row * W
    masks = []
    for ky in range(3):
        for kx in range(3):
            dy, dx = 2 * (ky - 1), 2 * (kx - 1)
            valid = ((row + dy >= 0) & (row + dy < H) &
                     (col + dx >= 0) & (col + dx < W))
            masks.append(valid.astype(jnp.float32))
    return jnp.stack(masks, axis=0)


@jax.jit
def bottleneck_pallas(x_nchw, w1, w2, w3):
    """Bottleneck forward.

    x_nchw: (B, Cin, H, W)        PyTorch NCHW input
    w1    : (Cin, Cmid)           conv1 1x1 weight      [cin, cout]
    w2    : (3, 3, Cmid, Cmid)    conv2 3x3 dil2 weight [ky, kx, cin, cout]
    w3    : (Cmid, Cout)          conv3 1x1 weight      [cin, cout]
    """
    B, Cin, H, W = x_nchw.shape
    Cmid = w1.shape[1]
    Cout = w3.shape[1]
    HW = H * W
    assert HW % 128 == 0 and Cin % 8 == 0 and Cmid % 8 == 0 and Cout % 8 == 0
    # TODO(synk): for production-sized images, tile the HW axis (4-row halo
    # = 2*dilation) sized for v7x's 64 MiB VMEM: keep the per-step slab
    # 9*Cmid*HW_tile*4B <= ~8 MiB double-buffered, which also stays under the
    # default scoped-VMEM limits on v5e/v6e without flag surgery.

    # Two grid steps when B is even (one per v7x TensorCore; halves per-step
    # grid overhead on single-TC v5e/v6e vs. grid=(B,)), else one image/step.
    Bblk = B // 2 if (B % 2 == 0 and B >= 2) else 1
    grid_b = B // Bblk

    # Free, contiguous reshapes only -- no image transposes in the wrapper.
    x_flat = x_nchw.reshape(B, Cin, HW)

    # Tiny one-off weight relayouts: kernel consumes (out-channels x K).
    # w2 column order (ky*3+kx)*Cmid + cin matches the slab's tap ordering.
    w1_k = jnp.transpose(w1, (1, 0))                                 # (Cmid, Cin)
    w2_k = jnp.transpose(w2, (3, 0, 1, 2)).reshape(Cmid, 9 * Cmid)   # (Cmid, 9*Cmid)
    w3_k = jnp.transpose(w3, (1, 0))                                 # (Cout, Cmid)

    masks = _boundary_masks(H, W)                                    # (9, HW)

    out_flat = pl.pallas_call(
        _make_bottleneck_kernel(H, W, Cmid, Bblk),
        out_shape=jax.ShapeDtypeStruct((B, Cout, HW), x_nchw.dtype),
        grid_spec=pltpu.PrefetchScalarGridSpec(
            num_scalar_prefetch=0,
            grid=(grid_b,),
            in_specs=[
                pl.BlockSpec((Bblk, Cin, HW), lambda b: (b, 0, 0)),
                pl.BlockSpec((Cmid, Cin), lambda b: (0, 0)),
                pl.BlockSpec((Cmid, 9 * Cmid), lambda b: (0, 0)),
                pl.BlockSpec((Cout, Cmid), lambda b: (0, 0)),
                pl.BlockSpec((9, HW), lambda b: (0, 0)),
            ],
            out_specs=pl.BlockSpec((Bblk, Cout, HW), lambda b: (b, 0, 0)),
            scratch_shapes=[pltpu.VMEM((9 * Cmid, HW), jnp.float32)],
        ),
        compiler_params=pltpu.CompilerParams(
            dimension_semantics=("parallel",)),
    )(x_flat, w1_k, w2_k, w3_k, masks)

    return out_flat.reshape(B, Cout, H, W)


def bottleneck_reference(x_nchw, w1, w2, w3):
    """Pure-JAX reference using lax conv (PyTorch NCHW / OIHW semantics)."""
    w1_oihw = jnp.transpose(w1, (1, 0))[:, :, None, None]
    w2_oihw = jnp.transpose(w2, (3, 2, 0, 1))
    w3_oihw = jnp.transpose(w3, (1, 0))[:, :, None, None]
    dn = jax.lax.conv_dimension_numbers(x_nchw.shape, w1_oihw.shape,
                                        ("NCHW", "OIHW", "NCHW"))
    t = jax.lax.conv_general_dilated(x_nchw, w1_oihw, (1, 1), "VALID",
                                     dimension_numbers=dn)
    t = jnp.maximum(t, 0.0)
    t = jax.lax.conv_general_dilated(t, w2_oihw, (1, 1), ((2, 2), (2, 2)),
                                     rhs_dilation=(2, 2), dimension_numbers=dn)
    t = jnp.maximum(t, 0.0)
    t = jax.lax.conv_general_dilated(t, w3_oihw, (1, 1), "VALID",
                                     dimension_numbers=dn)
    return t


if __name__ == "__main__":
    # Bottleneck(32, 32) exactly as instantiated in SPANet; small spatial size.
    B, Cin, Cmid, H, W = 2, 32, 32, 16, 16

    key = jax.random.PRNGKey(0)
    kx_, k1, k2, k3 = jax.random.split(key, 4)
    x = jax.random.normal(kx_, (B, Cin, H, W), jnp.float32)
    # deterministic synthetic weights (kaiming-ish scale; no checkpoint load)
    w1 = jax.random.normal(k1, (Cin, Cmid), jnp.float32) * (2.0 / Cin) ** 0.5
    w2 = jax.random.normal(k2, (3, 3, Cmid, Cmid), jnp.float32) * (2.0 / (9 * Cmid)) ** 0.5
    w3 = jax.random.normal(k3, (Cmid, Cmid), jnp.float32) * (2.0 / Cmid) ** 0.5

    out = jax.block_until_ready(bottleneck_pallas(x, w1, w2, w3))
    ref = jax.block_until_ready(bottleneck_reference(x, w1, w2, w3))

    assert out.shape == (B, Cmid, H, W), out.shape
    max_err = float(jnp.max(jnp.abs(out - ref)))
    # f32 everywhere; tolerance covers reassociation of the fused K=9*C matmul
    # and MXU vs. XLA-conv f32 pass differences.
    assert jnp.allclose(out, ref, atol=1e-3, rtol=1e-3), max_err
    print("KERNEL_OK")
</pallas_src>

<mosaic_0001>
module attributes {stable_mosaic.version = 11 : i64} {
  func.func @kernel(%arg0: i32, %arg1: memref<1x32x256xf32, #tpu.memory_space<vmem>>, %arg2: memref<32x32xf32, #tpu.memory_space<vmem>>, %arg3: memref<32x288xf32, #tpu.memory_space<vmem>>, %arg4: memref<32x32xf32, #tpu.memory_space<vmem>>, %arg5: memref<9x256xf32, #tpu.memory_space<vmem>>, %arg6: memref<1x32x256xf32, #tpu.memory_space<vmem>>, %arg7: memref<288x256xf32, #tpu.memory_space<vmem>>) attributes {dimension_semantics = [#tpu.dimension_semantics<parallel>], iteration_bounds = array<i64: 2>, scalar_prefetch = 0 : i64, scratch_operands = 1 : i64, tpu.core_type = #tpu.core_type<tc>, window_params = [{transform_indices = @transform_0, window_bounds = array<i64: 1, 32, 256>}, {pipeline_mode = #tpu.pipeline_mode<synchronous>, transform_indices = @transform_1, window_bounds = array<i64: 32, 32>}, {pipeline_mode = #tpu.pipeline_mode<synchronous>, transform_indices = @transform_2, window_bounds = array<i64: 32, 288>}, {pipeline_mode = #tpu.pipeline_mode<synchronous>, transform_indices = @transform_3, window_bounds = array<i64: 32, 32>}, {pipeline_mode = #tpu.pipeline_mode<synchronous>, transform_indices = @transform_4, window_bounds = array<i64: 9, 256>}, {transform_indices = @transform_5, window_bounds = array<i64: 1, 32, 256>}]} {
    %c0 = arith.constant 0 : index
    %c0_0 = arith.constant 0 : index
    %0 = vector.load %arg2[%c0, %c0_0] : memref<32x32xf32, #tpu.memory_space<vmem>>, vector<32x32xf32>
    %c0_1 = arith.constant 0 : index
    %c0_2 = arith.constant 0 : index
    %1 = vector.load %arg3[%c0_1, %c0_2] : memref<32x288xf32, #tpu.memory_space<vmem>>, vector<32x288xf32>
    %c0_3 = arith.constant 0 : index
    %c0_4 = arith.constant 0 : index
    %2 = vector.load %arg4[%c0_3, %c0_4] : memref<32x32xf32, #tpu.memory_space<vmem>>, vector<32x32xf32>
    %c0_5 = arith.constant 0 : index
    %c0_6 = arith.constant 0 : index
    %c0_7 = arith.constant 0 : index
    %3 = vector.load %arg1[%c0_5, %c0_6, %c0_7] : memref<1x32x256xf32, #tpu.memory_space<vmem>>, vector<1x32x256xf32>
    %4 = vector.shape_cast %3 : vector<1x32x256xf32> to vector<32x256xf32>
    %cst = arith.constant dense<0.000000e+00> : vector<32x256xf32>
    %5 = tpu.matmul %0, %4, %cst {dimension_numbers = #tpu.dot_dimension_numbers<[1], [0], [0], [1], [0, 0, 1, 1], [], []>} : vector<32x32xf32>, vector<32x256xf32>, vector<32x256xf32> -> vector<32x256xf32>
    %cst_8 = arith.constant 0.000000e+00 : f32
    %6 = vector.broadcast %cst_8 : f32 to vector<32x256xf32>
    %7 = arith.maximumf %5, %6 : vector<32x256xf32>
    %c34_i32 = arith.constant 34 : i32
    %8 = tpu.dynamic_rotate %7 by %c34_i32 dim 1 : vector<32x256xf32>, i32 -> vector<32x256xf32>
    %c0_9 = arith.constant 0 : index
    %c0_10 = arith.constant 0 : index
    %9 = vector.load %arg5[%c0_9, %c0_10] : memref<9x256xf32, #tpu.memory_space<vmem>>, vector<1x256xf32>
    %10 = vector.broadcast %9 : vector<1x256xf32> to vector<32x256xf32>
    %11 = arith.mulf %8, %10 : vector<32x256xf32>
    %c0_11 = arith.constant 0 : index
    %c0_12 = arith.constant 0 : index
    %12 = vector.load %arg7[%c0_11, %c0_12] : memref<288x256xf32, #tpu.memory_space<vmem>>, vector<32x256xf32>
    tpu.vector_store %arg7[%c0_11, %c0_12], %11 {strides = array<i32>} : memref<288x256xf32, #tpu.memory_space<vmem>>, vector<32x256xf32>,
    %c32_i32 = arith.constant 32 : i32
    %13 = tpu.dynamic_rotate %7 by %c32_i32 dim 1 : vector<32x256xf32>, i32 -> vector<32x256xf32>
    %c1 = arith.constant 1 : index
    %c0_13 = arith.constant 0 : index
    %14 = vector.load %arg5[%c1, %c0_13] : memref<9x256xf32, #tpu.memory_space<vmem>>, vector<1x256xf32>
    %15 = vector.broadcast %14 : vector<1x256xf32> to vector<32x256xf32>
    %16 = arith.mulf %13, %15 : vector<32x256xf32>
    %c32 = arith.constant 32 : index
    %c0_14 = arith.constant 0 : index
    %17 = vector.load %arg7[%c32, %c0_14] : memref<288x256xf32, #tpu.memory_space<vmem>>, vector<32x256xf32>
    tpu.vector_store %arg7[%c32, %c0_14], %16 {strides = array<i32>} : memref<288x256xf32, #tpu.memory_space<vmem>>, vector<32x256xf32>,
    %c30_i32 = arith.constant 30 : i32
    %18 = tpu.dynamic_rotate %7 by %c30_i32 dim 1 : vector<32x256xf32>, i32 -> vector<32x256xf32>
    %c2 = arith.constant 2 : index
    %c0_15 = arith.constant 0 : index
    %19 = vector.load %arg5[%c2, %c0_15] : memref<9x256xf32, #tpu.memory_space<vmem>>, vector<1x256xf32>
    %20 = vector.broadcast %19 : vector<1x256xf32> to vector<32x256xf32>
    %21 = arith.mulf %18, %20 : vector<32x256xf32>
    %c64 = arith.constant 64 : index
    %c0_16 = arith.constant 0 : index
    %22 = vector.load %arg7[%c64, %c0_16] : memref<288x256xf32, #tpu.memory_space<vmem>>, vector<32x256xf32>
    tpu.vector_store %arg7[%c64, %c0_16], %21 {strides = array<i32>} : memref<288x256xf32, #tpu.memory_space<vmem>>, vector<32x256xf32>,
    %c2_i32 = arith.constant 2 : i32
    %23 = tpu.dynamic_rotate %7 by %c2_i32 dim 1 : vector<32x256xf32>, i32 -> vector<32x256xf32>
    %c3 = arith.constant 3 : index
    %c0_17 = arith.constant 0 : index
    %24 = vector.load %arg5[%c3, %c0_17] : memref<9x256xf32, #tpu.memory_space<vmem>>, vector<1x256xf32>
    %25 = vector.broadcast %24 : vector<1x256xf32> to vector<32x256xf32>
    %26 = arith.mulf %23, %25 : vector<32x256xf32>
    %c96 = arith.constant 96 : index
    %c0_18 = arith.constant 0 : index
    %27 = vector.load %arg7[%c96, %c0_18] : memref<288x256xf32, #tpu.memory_space<vmem>>, vector<32x256xf32>
    tpu.vector_store %arg7[%c96, %c0_18], %26 {strides = array<i32>} : memref<288x256xf32, #tpu.memory_space<vmem>>, vector<32x256xf32>,
    %c128 = arith.constant 128 : index
    %c0_19 = arith.constant 0 : index
    %28 = vector.load %arg7[%c128, %c0_19] : memref<288x256xf32, #tpu.memory_space<vmem>>, vector<32x256xf32>
    tpu.vector_store %arg7[%c128, %c0_19], %7 {strides = array<i32>} : memref<288x256xf32, #tpu.memory_space<vmem>>, vector<32x256xf32>,
    %c254_i32 = arith.constant 254 : i32
    %29 = tpu.dynamic_rotate %7 by %c254_i32 dim 1 : vector<32x256xf32>, i32 -> vector<32x256xf32>
    %c5 = arith.constant 5 : index
    %c0_20 = arith.constant 0 : index
    %30 = vector.load %arg5[%c5, %c0_20] : memref<9x256xf32, #tpu.memory_space<vmem>>, vector<1x256xf32>
    %31 = vector.broadcast %30 : vector<1x256xf32> to vector<32x256xf32>
    %32 = arith.mulf %29, %31 : vector<32x256xf32>
    %c160 = arith.constant 160 : index
    %c0_21 = arith.constant 0 : index
    %33 = vector.load %arg7[%c160, %c0_21] : memref<288x256xf32, #tpu.memory_space<vmem>>, vector<32x256xf32>
    tpu.vector_store %arg7[%c160, %c0_21], %32 {strides = array<i32>} : memref<288x256xf32, #tpu.memory_space<vmem>>, vector<32x256xf32>,
    %c226_i32 = arith.constant 226 : i32
    %34 = tpu.dynamic_rotate %7 by %c226_i32 dim 1 : vector<32x256xf32>, i32 -> vector<32x256xf32>
    %c6 = arith.constant 6 : index
    %c0_22 = arith.constant 0 : index
    %35 = vector.load %arg5[%c6, %c0_22] : memref<9x256xf32, #tpu.memory_space<vmem>>, vector<1x256xf32>
    %36 = vector.broadcast %35 : vector<1x256xf32> to vector<32x256xf32>
    %37 = arith.mulf %34, %36 : vector<32x256xf32>
    %c192 = arith.constant 192 : index
    %c0_23 = arith.constant 0 : index
    %38 = vector.load %arg7[%c192, %c0_23] : memref<288x256xf32, #tpu.memory_space<vmem>>, vector<32x256xf32>
    tpu.vector_store %arg7[%c192, %c0_23], %37 {strides = array<i32>} : memref<288x256xf32, #tpu.memory_space<vmem>>, vector<32x256xf32>,
    %c224_i32 = arith.constant 224 : i32
    %39 = tpu.dynamic_rotate %7 by %c224_i32 dim 1 : vector<32x256xf32>, i32 -> vector<32x256xf32>
    %c7 = arith.constant 7 : index
    %c0_24 = arith.constant 0 : index
    %40 = vector.load %arg5[%c7, %c0_24] : memref<9x256xf32, #tpu.memory_space<vmem>>, vector<1x256xf32>
    %41 = vector.broadcast %40 : vector<1x256xf32> to vector<32x256xf32>
    %42 = arith.mulf %39, %41 : vector<32x256xf32>
    %c224 = arith.constant 224 : index
    %c0_25 = arith.constant 0 : index
    %43 = vector.load %arg7[%c224, %c0_25] : memref<288x256xf32, #tpu.memory_space<vmem>>, vector<32x256xf32>
    tpu.vector_store %arg7[%c224, %c0_25], %42 {strides = array<i32>} : memref<288x256xf32, #tpu.memory_space<vmem>>, vector<32x256xf32>,
    %c222_i32 = arith.constant 222 : i32
    %44 = tpu.dynamic_rotate %7 by %c222_i32 dim 1 : vector<32x256xf32>, i32 -> vector<32x256xf32>
    %c8 = arith.constant 8 : index
    %c0_26 = arith.constant 0 : index
    %45 = vector.load %arg5[%c8, %c0_26] : memref<9x256xf32, #tpu.memory_space<vmem>>, vector<1x256xf32>
    %46 = vector.broadcast %45 : vector<1x256xf32> to vector<32x256xf32>
    %47 = arith.mulf %44, %46 : vector<32x256xf32>
    %c256 = arith.constant 256 : index
    %c0_27 = arith.constant 0 : index
    %48 = vector.load %arg7[%c256, %c0_27] : memref<288x256xf32, #tpu.memory_space<vmem>>, vector<32x256xf32>
    tpu.vector_store %arg7[%c256, %c0_27], %47 {strides = array<i32>} : memref<288x256xf32, #tpu.memory_space<vmem>>, vector<32x256xf32>,
    %c0_28 = arith.constant 0 : index
    %c0_29 = arith.constant 0 : index
    %49 = vector.load %arg7[%c0_28, %c0_29] : memref<288x256xf32, #tpu.memory_space<vmem>>, vector<288x256xf32>
    %cst_30 = arith.constant dense<0.000000e+00> : vector<32x256xf32>
    %50 = tpu.matmul %1, %49, %cst_30 {dimension_numbers = #tpu.dot_dimension_numbers<[1], [0], [0], [1], [0, 0, 1, 1], [], []>} : vector<32x288xf32>, vector<288x256xf32>, vector<32x256xf32> -> vector<32x256xf32>
    %cst_31 = arith.constant 0.000000e+00 : f32
    %51 = vector.broadcast %cst_31 : f32 to vector<32x256xf32>
    %52 = arith.maximumf %50, %51 : vector<32x256xf32>
    %cst_32 = arith.constant dense<0.000000e+00> : vector<32x256xf32>
    %53 = tpu.matmul %2, %52, %cst_32 {dimension_numbers = #tpu.dot_dimension_numbers<[1], [0], [0], [1], [0, 0, 1, 1], [], []>} : vector<32x32xf32>, vector<32x256xf32>, vector<32x256xf32> -> vector<32x256xf32>
    %c0_33 = arith.constant 0 : index
    %c0_34 = arith.constant 0 : index
    %c0_35 = arith.constant 0 : index
    %54 = vector.load %arg6[%c0_33, %c0_34, %c0_35] : memref<1x32x256xf32, #tpu.memory_space<vmem>>, vector<1x32x256xf32>
    %55 = vector.shape_cast %54 : vector<1x32x256xf32> to vector<32x256xf32>
    %56 = vector.shape_cast %53 : vector<32x256xf32> to vector<1x32x256xf32>
    tpu.vector_store %arg6[%c0_33, %c0_34, %c0_35], %56 {strides = array<i32>} : memref<1x32x256xf32, #tpu.memory_space<vmem>>, vector<1x32x256xf32>,
    return
  }
  func.func @transform_0(%arg0: i32) -> (i32, i32, i32) {
    %c0_i32 = arith.constant 0 : i32
    %c0_i32_0 = arith.constant 0 : i32
    %c0_i32_1 = arith.constant 0 : i32
    return %arg0, %c0_i32, %c0_i32_0 : i32, i32, i32
  }
  func.func @transform_1(%arg0: i32) -> (i32, i32) {
    %c0_i32 = arith.constant 0 : i32
    %c0_i32_0 = arith.constant 0 : i32
    %c0_i32_1 = arith.constant 0 : i32
    return %c0_i32, %c0_i32_0 : i32, i32
  }
  func.func @transform_2(%arg0: i32) -> (i32, i32) {
    %c0_i32 = arith.constant 0 : i32
    %c0_i32_0 = arith.constant 0 : i32
    %c0_i32_1 = arith.constant 0 : i32
    return %c0_i32, %c0_i32_0 : i32, i32
  }
  func.func @transform_3(%arg0: i32) -> (i32, i32) {
    %c0_i32 = arith.constant 0 : i32
    %c0_i32_0 = arith.constant 0 : i32
    %c0_i32_1 = arith.constant 0 : i32
    return %c0_i32, %c0_i32_0 : i32, i32
  }
  func.func @transform_4(%arg0: i32) -> (i32, i32) {
    %c0_i32 = arith.constant 0 : i32
    %c0_i32_0 = arith.constant 0 : i32
    %c0_i32_1 = arith.constant 0 : i32
    return %c0_i32, %c0_i32_0 : i32, i32
  }
  func.func @transform_5(%arg0: i32) -> (i32, i32, i32) {
    %c0_i32 = arith.constant 0 : i32
    %c0_i32_0 = arith.constant 0 : i32
    %c0_i32_1 = arith.constant 0 : i32
    return %arg0, %c0_i32, %c0_i32_0 : i32, i32, i32
  }
}

</mosaic_0001>

<llo_original>
// kernel: bottleneck_pallas.1
$region0: #{bottleneck_pallas.1}
  #allocation0 [shape = 'u32[]', space=smem, size = 0x4, offset = 0x4, fixed_abs, tag = 'smem constant byte address 0x4 - core index']
  #allocation1 [shape = 'u32[144,128]{1,0:T(1,128)}', space=vmem, size = 0x12000, scoped, tag = 'internal scratch']
  #allocation2 [shape = 'f32[288,256]{1,0:T(8,128)}', space=vmem, size = 0x48000, scoped, tag = 'scratch operand']
  %s0 = inlined_call_operand.vmem [shape: f32[2,32,256], index: 0, kind: input, shape index: {}]
  %s1 = inlined_call_operand.vmem [shape: f32[32,32], index: 1, kind: input, shape index: {}]
  %s2 = inlined_call_operand.vmem [shape: f32[32,288], index: 2, kind: input, shape index: {}]
  %s3 = inlined_call_operand.vmem [shape: f32[32,32], index: 3, kind: input, shape index: {}]
  %s4 = inlined_call_operand.vmem [shape: f32[9,256], index: 4, kind: input, shape index: {}]
  %s5 = inlined_call_operand.vmem [shape: f32[2,32,256], index: 5, kind: output, shape index: {}]
  %s6 = sld [smem:[#allocation0]]
  $region53: #{bottleneck_pallas.1} parent=0
    _
  %s8 = ssub.s32 1, %s6
  %s9 = scalar_select 0, %s8, %s6
  loop: start=0, step=1, limit=4
  $region2: #{bottleneck_pallas.1} parent=0 // loop_pre_header
    _
  $region3: #{bottleneck_pallas.1} parent=0 // loop_header
    %s11 = sphi 0, %s15
    %p12 = scmp.ge.s32.totalorder %s11, 4
    %s21 = sphi 0, %s23
    %s24 = sphi 0, %s21
    %s25 = sphi 0, %s24
    %s41 = sphi 0, %s25
    %s45 = sphi 0, %s45
    %s47 = sphi 0, %s45
    %s48 = sphi 0, %s47
    %s62 = sphi 0, %s48
    %s66 = sphi 0, %s66
    %s68 = sphi 0, %s66
    %s69 = sphi 0, %s68
    %s83 = sphi 0, %s69
    %s87 = sphi 0, %s87
    %s89 = sphi 0, %s87
    %s90 = sphi 0, %s89
    %s104 = sphi 0, %s90
    %s108 = sphi 0, %s108
    %s110 = sphi 0, %s108
    %s111 = sphi 0, %s110
    %s125 = sphi 0, %s111
    %s131 = sphi 0, %s133
    %s134 = sphi 0, %s131
    %s135 = sphi 0, %s134
    %s151 = sphi 0, %s135
  $region4: #{bottleneck_pallas.1} parent=0 // loop_header_branch
    %14 = sbr.rel (%p12) target = $region8
  $region5: #{bottleneck_pallas.1} parent=0 // loop_body
    %s16 = ssub.s32 %s11, 1
    %s17 = ssub.s32 %s11, 2
    %s18 = sadd.s32 %s11, 1
    %s19 = ssub.s32 %s11, %s18
    %p20 = scmp.eq.s32.totalorder %s19, 0
    %s22 = sadd.s32 %s21, 1
    %s23 = scalar_select %p20, %s21, %s22
    %p26 = pneg %p20
    %p27 = scmp.eq.s32.totalorder %s11, 1
    %p28 = por %p26, %p27
    %p29 = scmp.ne.s32.totalorder %s21, %s24
    %p30 = scmp.eq.s32.totalorder %s11, 0
    %p31 = por %p29, %p30
    %p32 = scmp.ne.s32.totalorder %s21, %s24
    %p33 = scmp.eq.s32.totalorder %s16, 1
    %p34 = por %p32, %p33
    %p35 = scmp.ne.s32.totalorder %s24, %s25
    %p36 = scmp.eq.s32.totalorder %s16, 0
    %p37 = por %p35, %p36
    %p38 = scmp.ne.s32.totalorder %s24, %s25
    %p39 = scmp.eq.s32.totalorder %s17, 1
    %p40 = por %p38, %p39
    %p42 = scmp.ne.s32.totalorder %s25, %s41
    %p43 = scmp.eq.s32.totalorder %s17, 0
    %p44 = por %p42, %p43
    %s46 = sadd.s32 %s45, 1
    %p49 = scmp.eq.s32.totalorder %s11, 1
    %p50 = scmp.ne.s32.totalorder %s45, %s47
    %p51 = scmp.eq.s32.totalorder %s11, 0
    %p52 = por %p50, %p51
    %p53 = scmp.ne.s32.totalorder %s45, %s47
    %p54 = scmp.eq.s32.totalorder %s16, 1
    %p55 = por %p53, %p54
    %p56 = scmp.ne.s32.totalorder %s47, %s48
    %p57 = scmp.eq.s32.totalorder %s16, 0
    %p58 = por %p56, %p57
    %p59 = scmp.ne.s32.totalorder %s47, %s48
    %p60 = scmp.eq.s32.totalorder %s17, 1
    %p61 = por %p59, %p60
    %p63 = scmp.ne.s32.totalorder %s48, %s62
    %p64 = scmp.eq.s32.totalorder %s17, 0
    %p65 = por %p63, %p64
    %s67 = sadd.s32 %s66, 1
    %p70 = scmp.eq.s32.totalorder %s11, 1
    %p71 = scmp.ne.s32.totalorder %s66, %s68
    %p72 = scmp.eq.s32.totalorder %s11, 0
    %p73 = por %p71, %p72
    %p74 = scmp.ne.s32.totalorder %s66, %s68
    %p75 = scmp.eq.s32.totalorder %s16, 1
    %p76 = por %p74, %p75
    %p77 = scmp.ne.s32.totalorder %s68, %s69
    %p78 = scmp.eq.s32.totalorder %s16, 0
    %p79 = por %p77, %p78
    %p80 = scmp.ne.s32.totalorder %s68, %s69
    %p81 = scmp.eq.s32.totalorder %s17, 1
    %p82 = por %p80, %p81
    %p84 = scmp.ne.s32.totalorder %s69, %s83
    %p85 = scmp.eq.s32.totalorder %s17, 0
    %p86 = por %p84, %p85
    %s88 = sadd.s32 %s87, 1
    %p91 = scmp.eq.s32.totalorder %s11, 1
    %p92 = scmp.ne.s32.totalorder %s87, %s89
    %p93 = scmp.eq.s32.totalorder %s11, 0
    %p94 = por %p92, %p93
    %p95 = scmp.ne.s32.totalorder %s87, %s89
    %p96 = scmp.eq.s32.totalorder %s16, 1
    %p97 = por %p95, %p96
    %p98 = scmp.ne.s32.totalorder %s89, %s90
    %p99 = scmp.eq.s32.totalorder %s16, 0
    %p100 = por %p98, %p99
    %p101 = scmp.ne.s32.totalorder %s89, %s90
    %p102 = scmp.eq.s32.totalorder %s17, 1
    %p103 = por %p101, %p102
    %p105 = scmp.ne.s32.totalorder %s90, %s104
    %p106 = scmp.eq.s32.totalorder %s17, 0
    %p107 = por %p105, %p106
    %s109 = sadd.s32 %s108, 1
    %p112 = scmp.eq.s32.totalorder %s11, 1
    %p113 = scmp.ne.s32.totalorder %s108, %s110
    %p114 = scmp.eq.s32.totalorder %s11, 0
    %p115 = por %p113, %p114
    %p116 = scmp.ne.s32.totalorder %s108, %s110
    %p117 = scmp.eq.s32.totalorder %s16, 1
    %p118 = por %p116, %p117
    %p119 = scmp.ne.s32.totalorder %s110, %s111
    %p120 = scmp.eq.s32.totalorder %s16, 0
    %p121 = por %p119, %p120
    %p122 = scmp.ne.s32.totalorder %s110, %s111
    %p123 = scmp.eq.s32.totalorder %s17, 1
    %p124 = por %p122, %p123
    %p126 = scmp.ne.s32.totalorder %s111, %s125
    %p127 = scmp.eq.s32.totalorder %s17, 0
    %p128 = por %p126, %p127
    %s129 = ssub.s32 %s11, %s18
    %p130 = scmp.eq.s32.totalorder %s129, 0
    %s132 = sadd.s32 %s131, 1
    %s133 = scalar_select %p130, %s131, %s132
    %p136 = pneg %p130
    %p137 = scmp.eq.s32.totalorder %s11, 1
    %p138 = por %p136, %p137
    %p139 = scmp.ne.s32.totalorder %s131, %s134
    %p140 = scmp.eq.s32.totalorder %s11, 0
    %p141 = por %p139, %p140
    %p142 = scmp.ne.s32.totalorder %s131, %s134
    %p143 = scmp.eq.s32.totalorder %s16, 1
    %p144 = por %p142, %p143
    %p145 = scmp.ne.s32.totalorder %s134, %s135
    %p146 = scmp.eq.s32.totalorder %s16, 0
    %p147 = por %p145, %p146
    %p148 = scmp.ne.s32.totalorder %s134, %s135
    %p149 = scmp.eq.s32.totalorder %s17, 1
    %p150 = por %p148, %p149
    %p152 = scmp.ne.s32.totalorder %s135, %s151
    %p153 = scmp.eq.s32.totalorder %s17, 0
    %p154 = por %p152, %p153
    %p155 = scmp.le.s32.totalorder 1, %s11
    %p156 = scmp.lt.s32.totalorder %s11, 3
    %p157 = pnand %p155, %p156
    %p158 = pneg %p157
    // Predicated region
    $region9: #{bottleneck_pallas.1} parent=5 // pred_check
      _
    $region10: #{bottleneck_pallas.1} parent=5 // pred_check_branch
      %160 = sbr.rel (%p157) target = $region12
    $region11: #{bottleneck_pallas.1} parent=5 // pred_region
      %s161 = ssub.s32 %s11, 1
      // Predicated region
      $region13: #{bottleneck_pallas.1} parent=11 // pred_check
        %p162 = pneg %p58
      $region14: #{bottleneck_pallas.1} parent=11 // pred_check_branch
        %164 = sbr.rel (%p162) target = $region16
      $region15: #{bottleneck_pallas.1} parent=11 // pred_region
        _
      $region16: #{bottleneck_pallas.1} parent=11 // pred_fallthru
        _
      // Predicated region
      $region17: #{bottleneck_pallas.1} parent=11 // pred_check
        %p165 = pneg %p79
      $region18: #{bottleneck_pallas.1} parent=11 // pred_check_branch
        %167 = sbr.rel (%p165) target = $region20
      $region19: #{bottleneck_pallas.1} parent=11 // pred_region
        _
      $region20: #{bottleneck_pallas.1} parent=11 // pred_fallthru
        _
      // Predicated region
      $region21: #{bottleneck_pallas.1} parent=11 // pred_check
        %p168 = pneg %p100
      $region22: #{bottleneck_pallas.1} parent=11 // pred_check_branch
        %170 = sbr.rel (%p168) target = $region24
      $region23: #{bottleneck_pallas.1} parent=11 // pred_region
        _
      $region24: #{bottleneck_pallas.1} parent=11 // pred_fallthru
        _
      // Predicated region
      $region25: #{bottleneck_pallas.1} parent=11 // pred_check
        %p171 = pneg %p121
      $region26: #{bottleneck_pallas.1} parent=11 // pred_check_branch
        %173 = sbr.rel (%p171) target = $region28
      $region27: #{bottleneck_pallas.1} parent=11 // pred_region
        _
      $region28: #{bottleneck_pallas.1} parent=11 // pred_fallthru
        _
    $region12: #{bottleneck_pallas.1} parent=5 // pred_fallthru
      _
    %p174 = scmp.lt.s32.totalorder %s11, 2
    // Predicated region
    $region29: #{bottleneck_pallas.1} parent=5 // pred_check
      %p175 = pneg %p174
    $region30: #{bottleneck_pallas.1} parent=5 // pred_check_branch
      %177 = sbr.rel (%p175) target = $region32
    $region31: #{bottleneck_pallas.1} parent=5 // pred_region
      // Predicated region
      $region33: #{bottleneck_pallas.1} parent=31 // pred_check
        %p178 = pneg %p31
      $region34: #{bottleneck_pallas.1} parent=31 // pred_check_branch
        %180 = sbr.rel (%p178) target = $region36
      $region35: #{bottleneck_pallas.1} parent=31 // pred_region
        %p181 = scmp.lt.s32.totalorder %s11, 1
        %s182 = scalar_select %p181, %s11, 1
        %s183 = smul.addr %s182, 8
        %s184 = smul.addr %s183, 8
        %s185 = scalar_lea.vmem %s0, %s184
      $region36: #{bottleneck_pallas.1} parent=31 // pred_fallthru
        _
    $region32: #{bottleneck_pallas.1} parent=5 // pred_fallthru
      _
    %p186 = scmp.le.s32.totalorder 1, %s11
    %p187 = scmp.lt.s32.totalorder %s11, 3
    %p188 = pnand %p186, %p187
    %p189 = pneg %p188
    // Predicated region
    $region37: #{bottleneck_pallas.1} parent=5 // pred_check
      _
    $region38: #{bottleneck_pallas.1} parent=5 // pred_check_branch
      %191 = sbr.rel (%p188) target = $region40
    $region39: #{bottleneck_pallas.1} parent=5 // pred_region
      %s192 = ssub.s32 %s11, 1
      %p193 = scmp.lt.s32.totalorder %s16, 1
      %s194 = scalar_select %p193, %s16, 1
      %s195 = smul.addr %s194, 8
      %s196 = smul.addr %s195, 8
      %s197 = scalar_lea.vmem %s0, %s196
      %p198 = pneg %p37
      %p199 = pneg %p34
      %p200 = pneg %p58
      %p201 = pneg %p55
      %p202 = pneg %p79
      %p203 = pneg %p76
      %p204 = pneg %p100
      %p205 = pneg %p97
      %p206 = pneg %p121
      %p207 = pneg %p118
      %p208 = pneg %p147
      %p209 = pneg %p144
      %p210 = scmp.lt.s32.totalorder %s16, 1
      %s211 = scalar_select %p210, %s16, 1
      %s212 = smul.addr %s211, 8
      %s213 = smul.addr %s212, 8
      %s214 = scalar_lea.vmem %s5, %s213
      %p215 = scmp.lt.s32.totalorder %s16, 1
      %s216 = scalar_select %p215, %s16, 1
      %s217 = smul.addr %s216, 8
      %s218 = smul.addr %s217, 8
      %s219 = scalar_lea.vmem %s0, %s218
      %p220 = scmp.lt.s32.totalorder %s16, 1
      %s221 = scalar_select %p220, %s16, 1
      %s222 = smul.addr %s221, 8
      %s223 = smul.addr %s222, 8
      %s224 = scalar_lea.vmem %s5, %s223
      %v225 = vld [vmem:[%s1] sm:$0xff]
      %v226 = vld [vmem:[%s1 + $0x8] sm:$0xff]
      %v227 = vld [vmem:[%s1 + $0x10] sm:$0xff]
      %v228 = vld [vmem:[%s1 + $0x18] sm:$0xff]
      %v229 = vld [vmem:[%s2] sm:$0xff]
      %v230 = vld [vmem:[%s2 + $0x8] sm:$0xff]
      %v231 = vld [vmem:[%s2 + $0x10] sm:$0xff]
      %v232 = vld [vmem:[%s2 + $0x18] sm:$0xff]
      %v233 = vld [vmem:[%s2 + $0x20] sm:$0xff]
      %v234 = vld [vmem:[%s2 + $0x28] sm:$0xff]
      %v235 = vld [vmem:[%s2 + $0x30] sm:$0xff]
      %v236 = vld [vmem:[%s2 + $0x38] sm:$0xff]
      %v237 = vld [vmem:[%s2 + $0x40] sm:$0xff]
      %v238 = vld [vmem:[%s2 + $0x48] sm:$0xff]
      %v239 = vld [vmem:[%s2 + $0x50] sm:$0xff]
      %v240 = vld [vmem:[%s2 + $0x58] sm:$0xff]
      %v241 = vld [vmem:[%s3] sm:$0xff]
      %v242 = vld [vmem:[%s3 + $0x8] sm:$0xff]
      %v243 = vld [vmem:[%s3 + $0x10] sm:$0xff]
      %v244 = vld [vmem:[%s3 + $0x18] sm:$0xff]
      %v245 = vld [vmem:[%s219] sm:$0xff]
      %v246 = vld [vmem:[%s219 + $0x8] sm:$0xff]
      %v247 = vld [vmem:[%s219 + $0x10] sm:$0xff]
      %v248 = vld [vmem:[%s219 + $0x18] sm:$0xff]
      %v249 = vld [vmem:[%s219 + $0x20] sm:$0xff]
      %v250 = vld [vmem:[%s219 + $0x28] sm:$0xff]
      %v251 = vld [vmem:[%s219 + $0x30] sm:$0xff]
      %v252 = vld [vmem:[%s219 + $0x38] sm:$0xff]
      %vm253 = vcmask 261120
      %v255 = vsel %vm253, %v225, 0
      %v258 = vsel %vm253, %v226, 0
      %v261 = vsel %vm253, %v227, 0
      %v264 = vsel %vm253, %v228, 0
      %266 = vmatprep.subr.mxu0 %v246
      %267 = vmatpush1.msra.mxu0 %v245
      %268 = vmatprep.subr.mxu0 %v248
      %269 = vmatpush1.msra.mxu0 %v247
      %270 = vmatprep.subr.mxu0 %v250
      %271 = vmatpush1.msra.mxu0 %v249
      %272 = vmatprep.subr.mxu0 %v252
      %273 = vmatpush1.msra.mxu0 %v251
      %274 = vmatprep.subr.mxu0 0.0
      %275 = vmatpush1.msra.mxu0 0.0
      %276 = vmatprep.subr.mxu0 0.0
      %277 = vmatpush1.msra.mxu0 0.0
      %278 = vmatprep.subr.mxu0 0.0
      %279 = vmatpush1.msra.mxu0 0.0
      %280 = vmatprep.subr.mxu0 0.0
      %281 = vmatpush1.msra.mxu0 0.0
      %282 = vmatprep.subr.mxu0 0.0
      %283 = vmatpush1.msra.mxu0 0.0
      %284 = vmatprep.subr.mxu0 0.0
      %285 = vmatpush1.msra.mxu0 0.0
      %286 = vmatprep.subr.mxu0 0.0
      %287 = vmatpush1.msra.mxu0 0.0
      %288 = vmatprep.subr.mxu0 0.0
      %289 = vmatpush1.msra.mxu0 0.0
      %290 = vmatprep.subr.mxu0 0.0
      %291 = vmatpush1.msra.mxu0 0.0
      %292 = vmatprep.subr.mxu0 0.0
      %293 = vmatpush1.msra.mxu0 0.0
      %294 = vmatprep.subr.mxu0 0.0
      %295 = vmatpush1.msra.mxu0 0.0
      %296 = vmatprep.subr.mxu0 0.0
      %297 = vmatpush1.msra.mxu0 0.0
      %298 = vmatprep.subr.mxu0 0.0
      %299 = vmatpush1.msra.mxu0 0.0
      %300 = vmatprep.subr.mxu0 0.0
      %301 = vmatpush1.msra.mxu0 0.0
      %302 = vmatprep.subr.mxu0 0.0
      %303 = vmatpush1.msra.mxu0 0.0
      %304 = vmatprep.subr.mxu0 0.0
      %305 = vmatpush1.msra.mxu0 0.0
      %306 = vmatprep.subr.mxu0 0.0
      %307 = vmatpush1.msra.mxu0 0.0
      %308 = vmatprep.subr.mxu0 0.0
      %309 = vmatpush1.msra.mxu0 0.0
      %310 = vmatprep.subr.mxu0 0.0
      %311 = vmatpush1.msra.mxu0 0.0
      %312 = vmatprep.subr.mxu0 0.0
      %313 = vmatpush1.msra.mxu0 0.0
      %314 = vmatprep.subr.mxu0 0.0
      %315 = vmatpush1.msra.mxu0 0.0
      %316 = vmatprep.subr.mxu0 0.0
      %317 = vmatpush1.msra.mxu0 0.0
      %318 = vmatprep.subr.mxu0 0.0
      %319 = vmatpush1.msra.mxu0 0.0
      %320 = vmatprep.subr.mxu0 0.0
      %321 = vmatpush1.msra.mxu0 0.0
      %322 = vmatprep.subr.mxu0 0.0
      %323 = vmatpush1.msra.mxu0 0.0
      %324 = vmatprep.subr.mxu0 0.0
      %325 = vmatpush1.msra.mxu0 0.0
      %326 = vmatprep.subr.mxu0 0.0
      %327 = vmatpush1.msra.mxu0 0.0
      %328 = vmatprep.subr.mxu0 0.0
      %329 = vmatpush1.msra.mxu0 0.0
      %330 = vmatprep.mubr.f32.mxu0 0.0
      %331 = vmatmul.mubr.f32.gmra.mrb[0].mxu0 %v255
      %v332 = vpop.f32.mrb[0].mxu0
      %v333 = vadd.f32 0.0, %v332
      %v334 = vpop.f32.mrb[0].mxu0
      %v335 = vadd.f32 0.0, %v334
      %336 = vmatprep.mubr.f32.mxu0 0.0
      %337 = vmatmul.mubr.f32.gmra.mrb[0].mxu0 %v258
      %v338 = vpop.f32.mrb[0].mxu0
      %v339 = vadd.f32 0.0, %v338
      %v340 = vpop.f32.mrb[0].mxu0
      %v341 = vadd.f32 0.0, %v340
      %342 = vmatprep.mubr.f32.mxu0 0.0
      %343 = vmatmul.mubr.f32.gmra.mrb[0].mxu0 %v261
      %v344 = vpop.f32.mrb[0].mxu0
      %v345 = vadd.f32 0.0, %v344
      %v346 = vpop.f32.mrb[0].mxu0
      %v347 = vadd.f32 0.0, %v346
      %348 = vmatprep.mubr.f32.mxu0 0.0
      %349 = vmatmul.mubr.f32.gmra.mrb[0].mxu0 %v264
      %v350 = vpop.f32.mrb[0].mxu0
      %v351 = vadd.f32 0.0, %v350
      %v352 = vpop.f32.mrb[0].mxu0
      %v353 = vadd.f32 0.0, %v352
      %354 = vdwg.mxu0
      %v355 = vmax.f32 %v333, 0.0
      %v356 = vmax.f32 %v335, 0.0
      %v357 = vmax.f32 %v339, 0.0
      %v358 = vmax.f32 %v341, 0.0
      %v359 = vmax.f32 %v345, 0.0
      %v360 = vmax.f32 %v347, 0.0
      %v361 = vmax.f32 %v351, 0.0
      %v362 = vmax.f32 %v353, 0.0
      %363 = vrot.lane.b32.xlu0 %v355, 34
      %v364 = vpop.permute.xlu0 %363
      %365 = vrot.lane.b32.xlu0 %v357, 34
      %v366 = vpop.permute.xlu0 %365
      %367 = vrot.lane.b32.xlu0 %v359, 34
      %v368 = vpop.permute.xlu0 %367
      %369 = vrot.lane.b32.xlu0 %v361, 34
      %v370 = vpop.permute.xlu0 %369
      %371 = vrot.lane.b32.xlu0 %v356, 34
      %v372 = vpop.permute.xlu0 %371
      %373 = vrot.lane.b32.xlu0 %v358, 34
      %v374 = vpop.permute.xlu0 %373
      %375 = vrot.lane.b32.xlu0 %v360, 34
      %v376 = vpop.permute.xlu0 %375
      %377 = vrot.lane.b32.xlu0 %v362, 34
      %v378 = vpop.permute.xlu0 %377
      %v379 = vlaneseq
      %v380 = vand.u32 %v379, 127
      %vm381 = vcmp.lt.s32.totalorder %v380, 34
      %v382 = vsel %vm381, %v364, %v372
      %v383 = vsel %vm381, %v366, %v374
      %v384 = vsel %vm381, %v368, %v376
      %v385 = vsel %vm381, %v370, %v378
      %v386 = vsel %vm381, %v372, %v364
      %v387 = vsel %vm381, %v374, %v366
      %v388 = vsel %vm381, %v376, %v368
      %v389 = vsel %vm381, %v378, %v370
      %v390 = vld [vmem:[%s4] ss:$8 sm:$0x3]
      %v392 = vlaneseq
      %v393 = vshrl.u32 %v392, 7
      %v394 = vsub.s32 0, %v393
      %v395 = vrot.slane %v390, %v394
      %v396 = vlaneseq
      %v397 = vshrl.u32 %v396, 7
      %v398 = vsub.s32 1, %v397
      %v399 = vrot.slane %v390, %v398
      %v402 = vmul.f32 %v386, %v395
      %v403 = vmul.f32 %v382, %v399
      %v404 = vmul.f32 %v387, %v395
      %v405 = vmul.f32 %v383, %v399
      %v406 = vmul.f32 %v388, %v395
      %v407 = vmul.f32 %v384, %v399
      %v408 = vmul.f32 %v389, %v395
      %v409 = vmul.f32 %v385, %v399
      %410 = vst [vmem:[#allocation2] sm:$0xff] %v402
      %411 = vst [vmem:[#allocation2 + $0x8] sm:$0xff] %v403
      %412 = vst [vmem:[#allocation2 + $0x10] sm:$0xff] %v404
      %413 = vst [vmem:[#allocation2 + $0x18] sm:$0xff] %v405
      %414 = vst [vmem:[#allocation2 + $0x20] sm:$0xff] %v406
      %415 = vst [vmem:[#allocation2 + $0x28] sm:$0xff] %v407
      %416 = vst [vmem:[#allocation2 + $0x30] sm:$0xff] %v408
      %417 = vst [vmem:[#allocation2 + $0x38] sm:$0xff] %v409
      %418 = vrot.lane.b32.xlu0 %v355, 32
      %v419 = vpop.permute.xlu0 %418
      %420 = vrot.lane.b32.xlu0 %v357, 32
      %v421 = vpop.permute.xlu0 %420
      %422 = vrot.lane.b32.xlu0 %v359, 32
      %v423 = vpop.permute.xlu0 %422
      %424 = vrot.lane.b32.xlu0 %v361, 32
      %v425 = vpop.permute.xlu0 %424
      %426 = vrot.lane.b32.xlu0 %v356, 32
      %v427 = vpop.permute.xlu0 %426
      %428 = vrot.lane.b32.xlu0 %v358, 32
      %v429 = vpop.permute.xlu0 %428
      %430 = vrot.lane.b32.xlu0 %v360, 32
      %v431 = vpop.permute.xlu0 %430
      %432 = vrot.lane.b32.xlu0 %v362, 32
      %v433 = vpop.permute.xlu0 %432
      %vm434 = vcmp.lt.s32.totalorder %v380, 32
      %v435 = vsel %vm434, %v419, %v427
      %v436 = vsel %vm434, %v421, %v429
      %v437 = vsel %vm434, %v423, %v431
      %v438 = vsel %vm434, %v425, %v433
      %v439 = vsel %vm434, %v427, %v419
      %v440 = vsel %vm434, %v429, %v421
      %v441 = vsel %vm434, %v431, %v423
      %v442 = vsel %vm434, %v433, %v425
      %s443 = scalar_lea.vmem %s4, 1
      %v444 = vld [vmem:[%s443] ss:$8 sm:$0x3]
      %v446 = vlaneseq
      %v447 = vshrl.u32 %v446, 7
      %v448 = vsub.s32 0, %v447
      %v449 = vrot.slane %v444, %v448
      %v450 = vlaneseq
      %v451 = vshrl.u32 %v450, 7
      %v452 = vsub.s32 1, %v451
      %v453 = vrot.slane %v444, %v452
      %v456 = vmul.f32 %v439, %v449
      %v457 = vmul.f32 %v435, %v453
      %v458 = vmul.f32 %v440, %v449
      %v459 = vmul.f32 %v436, %v453
      %v460 = vmul.f32 %v441, %v449
      %v461 = vmul.f32 %v437, %v453
      %v462 = vmul.f32 %v442, %v449
      %v463 = vmul.f32 %v438, %v453
      %464 = vst [vmem:[#allocation2 + $0x40] sm:$0xff] %v456
      %465 = vst [vmem:[#allocation2 + $0x48] sm:$0xff] %v457
      %466 = vst [vmem:[#allocation2 + $0x50] sm:$0xff] %v458
      %467 = vst [vmem:[#allocation2 + $0x58] sm:$0xff] %v459
      %468 = vst [vmem:[#allocation2 + $0x60] sm:$0xff] %v460
      %469 = vst [vmem:[#allocation2 + $0x68] sm:$0xff] %v461
      %470 = vst [vmem:[#allocation2 + $0x70] sm:$0xff] %v462
      %471 = vst [vmem:[#allocation2 + $0x78] sm:$0xff] %v463
      %472 = vrot.lane.b32.xlu0 %v355, 30
      %v473 = vpop.permute.xlu0 %472
      %474 = vrot.lane.b32.xlu0 %v357, 30
      %v475 = vpop.permute.xlu0 %474
      %476 = vrot.lane.b32.xlu0 %v359, 30
      %v477 = vpop.permute.xlu0 %476
      %478 = vrot.lane.b32.xlu0 %v361, 30
      %v479 = vpop.permute.xlu0 %478
      %480 = vrot.lane.b32.xlu0 %v356, 30
      %v481 = vpop.permute.xlu0 %480
      %482 = vrot.lane.b32.xlu0 %v358, 30
      %v483 = vpop.permute.xlu0 %482
      %484 = vrot.lane.b32.xlu0 %v360, 30
      %v485 = vpop.permute.xlu0 %484
      %486 = vrot.lane.b32.xlu0 %v362, 30
      %v487 = vpop.permute.xlu0 %486
      %vm488 = vcmp.lt.s32.totalorder %v380, 30
      %v489 = vsel %vm488, %v473, %v481
      %v490 = vsel %vm488, %v475, %v483
      %v491 = vsel %vm488, %v477, %v485
      %v492 = vsel %vm488, %v479, %v487
      %v493 = vsel %vm488, %v481, %v473
      %v494 = vsel %vm488, %v483, %v475
      %v495 = vsel %vm488, %v485, %v477
      %v496 = vsel %vm488, %v487, %v479
      %s497 = scalar_lea.vmem %s4, 2
      %v498 = vld [vmem:[%s497] ss:$8 sm:$0x3]
      %v500 = vlaneseq
      %v501 = vshrl.u32 %v500, 7
      %v502 = vsub.s32 0, %v501
      %v503 = vrot.slane %v498, %v502
      %v504 = vlaneseq
      %v505 = vshrl.u32 %v504, 7
      %v506 = vsub.s32 1, %v505
      %v507 = vrot.slane %v498, %v506
      %v510 = vmul.f32 %v493, %v503
      %v511 = vmul.f32 %v489, %v507
      %v512 = vmul.f32 %v494, %v503
      %v513 = vmul.f32 %v490, %v507
      %v514 = vmul.f32 %v495, %v503
      %v515 = vmul.f32 %v491, %v507
      %v516 = vmul.f32 %v496, %v503
      %v517 = vmul.f32 %v492, %v507
      %518 = vst [vmem:[#allocation2 + $0x80] sm:$0xff] %v510
      %519 = vst [vmem:[#allocation2 + $0x88] sm:$0xff] %v511
      %520 = vst [vmem:[#allocation2 + $0x90] sm:$0xff] %v512
      %521 = vst [vmem:[#allocation2 + $0x98] sm:$0xff] %v513
      %522 = vst [vmem:[#allocation2 + $0xa0] sm:$0xff] %v514
      %523 = vst [vmem:[#allocation2 + $0xa8] sm:$0xff] %v515
      %524 = vst [vmem:[#allocation2 + $0xb0] sm:$0xff] %v516
      %525 = vst [vmem:[#allocation2 + $0xb8] sm:$0xff] %v517
      %526 = vrot.lane.b32.xlu0 %v355, 2
      %v527 = vpop.permute.xlu0 %526
      %528 = vrot.lane.b32.xlu0 %v357, 2
      %v529 = vpop.permute.xlu0 %528
      %530 = vrot.lane.b32.xlu0 %v359, 2
      %v531 = vpop.permute.xlu0 %530
      %532 = vrot.lane.b32.xlu0 %v361, 2
      %v533 = vpop.permute.xlu0 %532
      %534 = vrot.lane.b32.xlu0 %v356, 2
      %v535 = vpop.permute.xlu0 %534
      %536 = vrot.lane.b32.xlu0 %v358, 2
      %v537 = vpop.permute.xlu0 %536
      %538 = vrot.lane.b32.xlu0 %v360, 2
      %v539 = vpop.permute.xlu0 %538
      %540 = vrot.lane.b32.xlu0 %v362, 2
      %v541 = vpop.permute.xlu0 %540
      %vm542 = vcmp.lt.s32.totalorder %v380, 2
      %v543 = vsel %vm542, %v527, %v535
      %v544 = vsel %vm542, %v529, %v537
      %v545 = vsel %vm542, %v531, %v539
      %v546 = vsel %vm542, %v533, %v541
      %v547 = vsel %vm542, %v535, %v527
      %v548 = vsel %vm542, %v537, %v529
      %v549 = vsel %vm542, %v539, %v531
      %v550 = vsel %vm542, %v541, %v533
      %s551 = scalar_lea.vmem %s4, 3
      %v552 = vld [vmem:[%s551] ss:$8 sm:$0x3]
      %v554 = vlaneseq
      %v555 = vshrl.u32 %v554, 7
      %v556 = vsub.s32 0, %v555
      %v557 = vrot.slane %v552, %v556
      %v558 = vlaneseq
      %v559 = vshrl.u32 %v558, 7
      %v560 = vsub.s32 1, %v559
      %v561 = vrot.slane %v552, %v560
      %v564 = vmul.f32 %v547, %v557
      %v565 = vmul.f32 %v543, %v561
      %v566 = vmul.f32 %v548, %v557
      %v567 = vmul.f32 %v544, %v561
      %v568 = vmul.f32 %v549, %v557
      %v569 = vmul.f32 %v545, %v561
      %v570 = vmul.f32 %v550, %v557
      %v571 = vmul.f32 %v546, %v561
      %572 = vst [vmem:[#allocation2 + $0xc0] sm:$0xff] %v564
      %573 = vst [vmem:[#allocation2 + $0xc8] sm:$0xff] %v565
      %574 = vst [vmem:[#allocation2 + $0xd0] sm:$0xff] %v566
      %575 = vst [vmem:[#allocation2 + $0xd8] sm:$0xff] %v567
      %576 = vst [vmem:[#allocation2 + $0xe0] sm:$0xff] %v568
      %577 = vst [vmem:[#allocation2 + $0xe8] sm:$0xff] %v569
      %578 = vst [vmem:[#allocation2 + $0xf0] sm:$0xff] %v570
      %579 = vst [vmem:[#allocation2 + $0xf8] sm:$0xff] %v571
      %580 = vst [vmem:[#allocation2 + $0x100] sm:$0xff] %v355
      %581 = vst [vmem:[#allocation2 + $0x108] sm:$0xff] %v356
      %582 = vst [vmem:[#allocation2 + $0x110] sm:$0xff] %v357
      %583 = vst [vmem:[#allocation2 + $0x118] sm:$0xff] %v358
      %584 = vst [vmem:[#allocation2 + $0x120] sm:$0xff] %v359
      %585 = vst [vmem:[#allocation2 + $0x128] sm:$0xff] %v360
      %586 = vst [vmem:[#allocation2 + $0x130] sm:$0xff] %v361
      %587 = vst [vmem:[#allocation2 + $0x138] sm:$0xff] %v362
      %588 = vrot.lane.b32.xlu0 %v355, 126
      %v589 = vpop.permute.xlu0 %588
      %590 = vrot.lane.b32.xlu0 %v357, 126
      %v591 = vpop.permute.xlu0 %590
      %592 = vrot.lane.b32.xlu0 %v359, 126
      %v593 = vpop.permute.xlu0 %592
      %594 = vrot.lane.b32.xlu0 %v361, 126
      %v595 = vpop.permute.xlu0 %594
      %596 = vrot.lane.b32.xlu0 %v356, 126
      %v597 = vpop.permute.xlu0 %596
      %598 = vrot.lane.b32.xlu0 %v358, 126
      %v599 = vpop.permute.xlu0 %598
      %600 = vrot.lane.b32.xlu0 %v360, 126
      %v601 = vpop.permute.xlu0 %600
      %602 = vrot.lane.b32.xlu0 %v362, 126
      %v603 = vpop.permute.xlu0 %602
      %vm604 = vcmp.lt.s32.totalorder %v380, 126
      %v605 = vsel %vm604, %v589, %v597
      %v606 = vsel %vm604, %v591, %v599
      %v607 = vsel %vm604, %v593, %v601
      %v608 = vsel %vm604, %v595, %v603
      %v609 = vsel %vm604, %v597, %v589
      %v610 = vsel %vm604, %v599, %v591
      %v611 = vsel %vm604, %v601, %v593
      %v612 = vsel %vm604, %v603, %v595
      %s613 = scalar_lea.vmem %s4, 5
      %v614 = vld [vmem:[%s613] ss:$8 sm:$0x3]
      %v616 = vlaneseq
      %v617 = vshrl.u32 %v616, 7
      %v618 = vsub.s32 0, %v617
      %v619 = vrot.slane %v614, %v618
      %v620 = vlaneseq
      %v621 = vshrl.u32 %v620, 7
      %v622 = vsub.s32 1, %v621
      %v623 = vrot.slane %v614, %v622
      %v626 = vmul.f32 %v605, %v619
      %v627 = vmul.f32 %v609, %v623
      %v628 = vmul.f32 %v606, %v619
      %v629 = vmul.f32 %v610, %v623
      %v630 = vmul.f32 %v607, %v619
      %v631 = vmul.f32 %v611, %v623
      %v632 = vmul.f32 %v608, %v619
      %v633 = vmul.f32 %v612, %v623
      %634 = vst [vmem:[#allocation2 + $0x140] sm:$0xff] %v626
      %635 = vst [vmem:[#allocation2 + $0x148] sm:$0xff] %v627
      %636 = vst [vmem:[#allocation2 + $0x150] sm:$0xff] %v628
      %637 = vst [vmem:[#allocation2 + $0x158] sm:$0xff] %v629
      %638 = vst [vmem:[#allocation2 + $0x160] sm:$0xff] %v630
      %639 = vst [vmem:[#allocation2 + $0x168] sm:$0xff] %v631
      %640 = vst [vmem:[#allocation2 + $0x170] sm:$0xff] %v632
      %641 = vst [vmem:[#allocation2 + $0x178] sm:$0xff] %v633
      %642 = vrot.lane.b32.xlu0 %v355, 98
      %v643 = vpop.permute.xlu0 %642
      %644 = vrot.lane.b32.xlu0 %v357, 98
      %v645 = vpop.permute.xlu0 %644
      %646 = vrot.lane.b32.xlu0 %v359, 98
      %v647 = vpop.permute.xlu0 %646
      %648 = vrot.lane.b32.xlu0 %v361, 98
      %v649 = vpop.permute.xlu0 %648
      %650 = vrot.lane.b32.xlu0 %v356, 98
      %v651 = vpop.permute.xlu0 %650
      %652 = vrot.lane.b32.xlu0 %v358, 98
      %v653 = vpop.permute.xlu0 %652
      %654 = vrot.lane.b32.xlu0 %v360, 98
      %v655 = vpop.permute.xlu0 %654
      %656 = vrot.lane.b32.xlu0 %v362, 98
      %v657 = vpop.permute.xlu0 %656
      %vm658 = vcmp.lt.s32.totalorder %v380, 98
      %v659 = vsel %vm658, %v643, %v651
      %v660 = vsel %vm658, %v645, %v653
      %v661 = vsel %vm658, %v647, %v655
      %v662 = vsel %vm658, %v649, %v657
      %v663 = vsel %vm658, %v651, %v643
      %v664 = vsel %vm658, %v653, %v645
      %v665 = vsel %vm658, %v655, %v647
      %v666 = vsel %vm658, %v657, %v649
      %s667 = scalar_lea.vmem %s4, 6
      %v668 = vld [vmem:[%s667] ss:$8 sm:$0x3]
      %v670 = vlaneseq
      %v671 = vshrl.u32 %v670, 7
      %v672 = vsub.s32 0, %v671
      %v673 = vrot.slane %v668, %v672
      %v674 = vlaneseq
      %v675 = vshrl.u32 %v674, 7
      %v676 = vsub.s32 1, %v675
      %v677 = vrot.slane %v668, %v676
      %v680 = vmul.f32 %v659, %v673
      %v681 = vmul.f32 %v663, %v677
      %v682 = vmul.f32 %v660, %v673
      %v683 = vmul.f32 %v664, %v677
      %v684 = vmul.f32 %v661, %v673
      %v685 = vmul.f32 %v665, %v677
      %v686 = vmul.f32 %v662, %v673
      %v687 = vmul.f32 %v666, %v677
      %688 = vst [vmem:[#allocation2 + $0x180] sm:$0xff] %v680
      %689 = vst [vmem:[#allocation2 + $0x188] sm:$0xff] %v681
      %690 = vst [vmem:[#allocation2 + $0x190] sm:$0xff] %v682
      %691 = vst [vmem:[#allocation2 + $0x198] sm:$0xff] %v683
      %692 = vst [vmem:[#allocation2 + $0x1a0] sm:$0xff] %v684
      %693 = vst [vmem:[#allocation2 + $0x1a8] sm:$0xff] %v685
      %694 = vst [vmem:[#allocation2 + $0x1b0] sm:$0xff] %v686
      %695 = vst [vmem:[#allocation2 + $0x1b8] sm:$0xff] %v687
      %696 = vrot.lane.b32.xlu0 %v355, 96
      %v697 = vpop.permute.xlu0 %696
      %698 = vrot.lane.b32.xlu0 %v357, 96
      %v699 = vpop.permute.xlu0 %698
      %700 = vrot.lane.b32.xlu0 %v359, 96
      %v701 = vpop.permute.xlu0 %700
      %702 = vrot.lane.b32.xlu0 %v361, 96
      %v703 = vpop.permute.xlu0 %702
      %704 = vrot.lane.b32.xlu0 %v356, 96
      %v705 = vpop.permute.xlu0 %704
      %706 = vrot.lane.b32.xlu0 %v358, 96
      %v707 = vpop.permute.xlu0 %706
      %708 = vrot.lane.b32.xlu0 %v360, 96
      %v709 = vpop.permute.xlu0 %708
      %710 = vrot.lane.b32.xlu0 %v362, 96
      %v711 = vpop.permute.xlu0 %710
      %vm712 = vcmp.lt.s32.totalorder %v380, 96
      %v713 = vsel %vm712, %v697, %v705
      %v714 = vsel %vm712, %v699, %v707
      %v715 = vsel %vm712, %v701, %v709
      %v716 = vsel %vm712, %v703, %v711
      %v717 = vsel %vm712, %v705, %v697
      %v718 = vsel %vm712, %v707, %v699
      %v719 = vsel %vm712, %v709, %v701
      %v720 = vsel %vm712, %v711, %v703
      %s721 = scalar_lea.vmem %s4, 7
      %v722 = vld [vmem:[%s721] ss:$8 sm:$0x3]
      %v724 = vlaneseq
      %v725 = vshrl.u32 %v724, 7
      %v726 = vsub.s32 0, %v725
      %v727 = vrot.slane %v722, %v726
      %v728 = vlaneseq
      %v729 = vshrl.u32 %v728, 7
      %v730 = vsub.s32 1, %v729
      %v731 = vrot.slane %v722, %v730
      %v734 = vmul.f32 %v713, %v727
      %v735 = vmul.f32 %v717, %v731
      %v736 = vmul.f32 %v714, %v727
      %v737 = vmul.f32 %v718, %v731
      %v738 = vmul.f32 %v715, %v727
      %v739 = vmul.f32 %v719, %v731
      %v740 = vmul.f32 %v716, %v727
      %v741 = vmul.f32 %v720, %v731
      %742 = vst [vmem:[#allocation2 + $0x1c0] sm:$0xff] %v734
      %743 = vst [vmem:[#allocation2 + $0x1c8] sm:$0xff] %v735
      %744 = vst [vmem:[#allocation2 + $0x1d0] sm:$0xff] %v736
      %745 = vst [vmem:[#allocation2 + $0x1d8] sm:$0xff] %v737
      %746 = vst [vmem:[#allocation2 + $0x1e0] sm:$0xff] %v738
      %747 = vst [vmem:[#allocation2 + $0x1e8] sm:$0xff] %v739
      %748 = vst [vmem:[#allocation2 + $0x1f0] sm:$0xff] %v740
      %749 = vst [vmem:[#allocation2 + $0x1f8] sm:$0xff] %v741
      %750 = vrot.lane.b32.xlu0 %v355, 94
      %v751 = vpop.permute.xlu0 %750
      %752 = vrot.lane.b32.xlu0 %v357, 94
      %v753 = vpop.permute.xlu0 %752
      %754 = vrot.lane.b32.xlu0 %v359, 94
      %v755 = vpop.permute.xlu0 %754
      %756 = vrot.lane.b32.xlu0 %v361, 94
      %v757 = vpop.permute.xlu0 %756
      %758 = vrot.lane.b32.xlu0 %v356, 94
      %v759 = vpop.permute.xlu0 %758
      %760 = vrot.lane.b32.xlu0 %v358, 94
      %v761 = vpop.permute.xlu0 %760
      %762 = vrot.lane.b32.xlu0 %v360, 94
      %v763 = vpop.permute.xlu0 %762
      %764 = vrot.lane.b32.xlu0 %v362, 94
      %v765 = vpop.permute.xlu0 %764
      %vm766 = vcmp.lt.s32.totalorder %v380, 94
      %v767 = vsel %vm766, %v751, %v759
      %v768 = vsel %vm766, %v753, %v761
      %v769 = vsel %vm766, %v755, %v763
      %v770 = vsel %vm766, %v757, %v765
      %v771 = vsel %vm766, %v759, %v751
      %v772 = vsel %vm766, %v761, %v753
      %v773 = vsel %vm766, %v763, %v755
      %v774 = vsel %vm766, %v765, %v757
      %s775 = scalar_lea.vmem %s4, 16
      %v776 = vld [vmem:[%s775] ss:$8 sm:$0x3]
      %v778 = vlaneseq
      %v779 = vshrl.u32 %v778, 7
      %v780 = vsub.s32 0, %v779
      %v781 = vrot.slane %v776, %v780
      %v782 = vlaneseq
      %v783 = vshrl.u32 %v782, 7
      %v784 = vsub.s32 1, %v783
      %v785 = vrot.slane %v776, %v784
      %v788 = vmul.f32 %v767, %v781
      %v789 = vmul.f32 %v771, %v785
      %v790 = vmul.f32 %v768, %v781
      %v791 = vmul.f32 %v772, %v785
      %v792 = vmul.f32 %v769, %v781
      %v793 = vmul.f32 %v773, %v785
      %v794 = vmul.f32 %v770, %v781
      %v795 = vmul.f32 %v774, %v785
      %796 = vst [vmem:[#allocation2 + $0x200] sm:$0xff] %v788
      %797 = vst [vmem:[#allocation2 + $0x208] sm:$0xff] %v789
      %798 = vst [vmem:[#allocation2 + $0x210] sm:$0xff] %v790
      %799 = vst [vmem:[#allocation2 + $0x218] sm:$0xff] %v791
      %800 = vst [vmem:[#allocation2 + $0x220] sm:$0xff] %v792
      %801 = vst [vmem:[#allocation2 + $0x228] sm:$0xff] %v793
      %802 = vst [vmem:[#allocation2 + $0x230] sm:$0xff] %v794
      %803 = vst [vmem:[#allocation2 + $0x238] sm:$0xff] %v795
      %v804 = vld [vmem:[#allocation2] sm:$0xff]
      %v805 = vld [vmem:[#allocation2 + $0x8] sm:$0xff]
      %v806 = vld [vmem:[#allocation2 + $0x10] sm:$0xff]
      %v807 = vld [vmem:[#allocation2 + $0x18] sm:$0xff]
      %v808 = vld [vmem:[#allocation2 + $0x20] sm:$0xff]
      %v809 = vld [vmem:[#allocation2 + $0x28] sm:$0xff]
      %v810 = vld [vmem:[#allocation2 + $0x30] sm:$0xff]
      %v811 = vld [vmem:[#allocation2 + $0x38] sm:$0xff]
      %v812 = vld [vmem:[#allocation2 + $0x40] sm:$0xff]
      %v813 = vld [vmem:[#allocation2 + $0x48] sm:$0xff]
      %v814 = vld [vmem:[#allocation2 + $0x50] sm:$0xff]
      %v815 = vld [vmem:[#allocation2 + $0x58] sm:$0xff]
      %v816 = vld [vmem:[#allocation2 + $0x60] sm:$0xff]
      %v817 = vld [vmem:[#allocation2 + $0x68] sm:$0xff]
      %v818 = vld [vmem:[#allocation2 + $0x70] sm:$0xff]
      %v819 = vld [vmem:[#allocation2 + $0x78] sm:$0xff]
      %v820 = vld [vmem:[#allocation2 + $0x80] sm:$0xff]
      %v821 = vld [vmem:[#allocation2 + $0x88] sm:$0xff]
      %v822 = vld [vmem:[#allocation2 + $0x90] sm:$0xff]
      %v823 = vld [vmem:[#allocation2 + $0x98] sm:$0xff]
      %v824 = vld [vmem:[#allocation2 + $0xa0] sm:$0xff]
      %v825 = vld [vmem:[#allocation2 + $0xa8] sm:$0xff]
      %v826 = vld [vmem:[#allocation2 + $0xb0] sm:$0xff]
      %v827 = vld [vmem:[#allocation2 + $0xb8] sm:$0xff]
      %v828 = vld [vmem:[#allocation2 + $0xc0] sm:$0xff]
      %v829 = vld [vmem:[#allocation2 + $0xc8] sm:$0xff]
      %v830 = vld [vmem:[#allocation2 + $0xd0] sm:$0xff]
      %v831 = vld [vmem:[#allocation2 + $0xd8] sm:$0xff]
      %v832 = vld [vmem:[#allocation2 + $0xe0] sm:$0xff]
      %v833 = vld [vmem:[#allocation2 + $0xe8] sm:$0xff]
      %v834 = vld [vmem:[#allocation2 + $0xf0] sm:$0xff]
      %v835 = vld [vmem:[#allocation2 + $0xf8] sm:$0xff]
      %v836 = vld [vmem:[#allocation2 + $0x100] sm:$0xff]
      %v837 = vld [vmem:[#allocation2 + $0x108] sm:$0xff]
      %v838 = vld [vmem:[#allocation2 + $0x110] sm:$0xff]
      %v839 = vld [vmem:[#allocation2 + $0x118] sm:$0xff]
      %v840 = vld [vmem:[#allocation2 + $0x120] sm:$0xff]
      %v841 = vld [vmem:[#allocation2 + $0x128] sm:$0xff]
      %v842 = vld [vmem:[#allocation2 + $0x130] sm:$0xff]
      %v843 = vld [vmem:[#allocation2 + $0x138] sm:$0xff]
      %v844 = vld [vmem:[#allocation2 + $0x140] sm:$0xff]
      %v845 = vld [vmem:[#allocation2 + $0x148] sm:$0xff]
      %v846 = vld [vmem:[#allocation2 + $0x150] sm:$0xff]
      %v847 = vld [vmem:[#allocation2 + $0x158] sm:$0xff]
      %v848 = vld [vmem:[#allocation2 + $0x160] sm:$0xff]
      %v849 = vld [vmem:[#allocation2 + $0x168] sm:$0xff]
      %v850 = vld [vmem:[#allocation2 + $0x170] sm:$0xff]
      %v851 = vld [vmem:[#allocation2 + $0x178] sm:$0xff]
      %v852 = vld [vmem:[#allocation2 + $0x180] sm:$0xff]
      %v853 = vld [vmem:[#allocation2 + $0x188] sm:$0xff]
      %v854 = vld [vmem:[#allocation2 + $0x190] sm:$0xff]
      %v855 = vld [vmem:[#allocation2 + $0x198] sm:$0xff]
      %v856 = vld [vmem:[#allocation2 + $0x1a0] sm:$0xff]
      %v857 = vld [vmem:[#allocation2 + $0x1a8] sm:$0xff]
      %v858 = vld [vmem:[#allocation2 + $0x1b0] sm:$0xff]
      %v859 = vld [vmem:[#allocation2 + $0x1b8] sm:$0xff]
      %v860 = vld [vmem:[#allocation2 + $0x1c0] sm:$0xff]
      %v861 = vld [vmem:[#allocation2 + $0x1c8] sm:$0xff]
      %v862 = vld [vmem:[#allocation2 + $0x1d0] sm:$0xff]
      %v863 = vld [vmem:[#allocation2 + $0x1d8] sm:$0xff]
      %v864 = vld [vmem:[#allocation2 + $0x1e0] sm:$0xff]
      %v865 = vld [vmem:[#allocation2 + $0x1e8] sm:$0xff]
      %v866 = vld [vmem:[#allocation2 + $0x1f0] sm:$0xff]
      %v867 = vld [vmem:[#allocation2 + $0x1f8] sm:$0xff]
      %v868 = vld [vmem:[#allocation2 + $0x200] sm:$0xff]
      %v869 = vld [vmem:[#allocation2 + $0x208] sm:$0xff]
      %v870 = vld [vmem:[#allocation2 + $0x210] sm:$0xff]
      %v871 = vld [vmem:[#allocation2 + $0x218] sm:$0xff]
      %v872 = vld [vmem:[#allocation2 + $0x220] sm:$0xff]
      %v873 = vld [vmem:[#allocation2 + $0x228] sm:$0xff]
      %v874 = vld [vmem:[#allocation2 + $0x230] sm:$0xff]
      %v875 = vld [vmem:[#allocation2 + $0x238] sm:$0xff]
      %v877 = vsel %vm253, %v231, 0
      %v880 = vsel %vm253, %v234, 0
      %v883 = vsel %vm253, %v237, 0
      %v886 = vsel %vm253, %v240, 0
      %888 = vmatprep.subr.mxu0 %v805
      %889 = vmatpush1.msra.mxu0 %v804
      %890 = vmatprep.subr.mxu0 %v807
      %891 = vmatpush1.msra.mxu0 %v806
      %892 = vmatprep.subr.mxu0 %v809
      %893 = vmatpush1.msra.mxu0 %v808
      %894 = vmatprep.subr.mxu0 %v811
      %895 = vmatpush1.msra.mxu0 %v810
      %896 = vmatprep.subr.mxu0 %v813
      %897 = vmatpush1.msra.mxu0 %v812
      %898 = vmatprep.subr.mxu0 %v815
      %899 = vmatpush1.msra.mxu0 %v814
      %900 = vmatprep.subr.mxu0 %v817
      %901 = vmatpush1.msra.mxu0 %v816
      %902 = vmatprep.subr.mxu0 %v819
      %903 = vmatpush1.msra.mxu0 %v818
      %904 = vmatprep.subr.mxu0 %v821
      %905 = vmatpush1.msra.mxu0 %v820
      %906 = vmatprep.subr.mxu0 %v823
      %907 = vmatpush1.msra.mxu0 %v822
      %908 = vmatprep.subr.mxu0 %v825
      %909 = vmatpush1.msra.mxu0 %v824
      %910 = vmatprep.subr.mxu0 %v827
      %911 = vmatpush1.msra.mxu0 %v826
      %912 = vmatprep.subr.mxu0 %v829
      %913 = vmatpush1.msra.mxu0 %v828
      %914 = vmatprep.subr.mxu0 %v831
      %915 = vmatpush1.msra.mxu0 %v830
      %916 = vmatprep.subr.mxu0 %v833
      %917 = vmatpush1.msra.mxu0 %v832
      %918 = vmatprep.subr.mxu0 %v835
      %919 = vmatpush1.msra.mxu0 %v834
      %920 = vmatprep.subr.mxu0 %v837
      %921 = vmatpush1.msra.mxu0 %v836
      %922 = vmatprep.subr.mxu0 %v839
      %923 = vmatpush1.msra.mxu0 %v838
      %924 = vmatprep.subr.mxu0 %v841
      %925 = vmatpush1.msra.mxu0 %v840
      %926 = vmatprep.subr.mxu0 %v843
      %927 = vmatpush1.msra.mxu0 %v842
      %928 = vmatprep.subr.mxu0 %v845
      %929 = vmatpush1.msra.mxu0 %v844
      %930 = vmatprep.subr.mxu0 %v847
      %931 = vmatpush1.msra.mxu0 %v846
      %932 = vmatprep.subr.mxu0 %v849
      %933 = vmatpush1.msra.mxu0 %v848
      %934 = vmatprep.subr.mxu0 %v851
      %935 = vmatpush1.msra.mxu0 %v850
      %936 = vmatprep.subr.mxu0 %v853
      %937 = vmatpush1.msra.mxu0 %v852
      %938 = vmatprep.subr.mxu0 %v855
      %939 = vmatpush1.msra.mxu0 %v854
      %940 = vmatprep.subr.mxu0 %v857
      %941 = vmatpush1.msra.mxu0 %v856
      %942 = vmatprep.subr.mxu0 %v859
      %943 = vmatpush1.msra.mxu0 %v858
      %944 = vmatprep.subr.mxu0 %v861
      %945 = vmatpush1.msra.mxu0 %v860
      %946 = vmatprep.subr.mxu0 %v863
      %947 = vmatpush1.msra.mxu0 %v862
      %948 = vmatprep.subr.mxu0 %v865
      %949 = vmatpush1.msra.mxu0 %v864
      %950 = vmatprep.subr.mxu0 %v867
      %951 = vmatpush1.msra.mxu0 %v866
      %952 = vmatprep.mubr.f32.mxu0 %v230
      %953 = vmatmul.mubr.f32.gmra.mrb[0].mxu0 %v229
      %v954 = vpop.f32.mrb[0].mxu0
      %v955 = vadd.f32 0.0, %v954
      %v956 = vpop.f32.mrb[0].mxu0
      %v957 = vadd.f32 0.0, %v956
      %958 = vmatprep.mubr.f32.mxu0 %v233
      %959 = vmatmul.mubr.f32.gmra.mrb[0].mxu0 %v232
      %v960 = vpop.f32.mrb[0].mxu0
      %v961 = vadd.f32 0.0, %v960
      %v962 = vpop.f32.mrb[0].mxu0
      %v963 = vadd.f32 0.0, %v962
      %964 = vmatprep.mubr.f32.mxu0 %v236
      %965 = vmatmul.mubr.f32.gmra.mrb[0].mxu0 %v235
      %v966 = vpop.f32.mrb[0].mxu0
      %v967 = vadd.f32 0.0, %v966
      %v968 = vpop.f32.mrb[0].mxu0
      %v969 = vadd.f32 0.0, %v968
      %970 = vmatprep.mubr.f32.mxu0 %v239
      %971 = vmatmul.mubr.f32.gmra.mrb[0].mxu0 %v238
      %v972 = vpop.f32.mrb[0].mxu0
      %v973 = vadd.f32 0.0, %v972
      %v974 = vpop.f32.mrb[0].mxu0
      %v975 = vadd.f32 0.0, %v974
      %976 = vdwg.mxu0
      %977 = vmatprep.subr.mxu0 %v869
      %978 = vmatpush1.msra.mxu0 %v868
      %979 = vmatprep.subr.mxu0 %v871
      %980 = vmatpush1.msra.mxu0 %v870
      %981 = vmatprep.subr.mxu0 %v873
      %982 = vmatpush1.msra.mxu0 %v872
      %983 = vmatprep.subr.mxu0 %v875
      %984 = vmatpush1.msra.mxu0 %v874
      %985 = vmatprep.subr.mxu0 0.0
      %986 = vmatpush1.msra.mxu0 0.0
      %987 = vmatprep.subr.mxu0 0.0
      %988 = vmatpush1.msra.mxu0 0.0
      %989 = vmatprep.subr.mxu0 0.0
      %990 = vmatpush1.msra.mxu0 0.0
      %991 = vmatprep.subr.mxu0 0.0
      %992 = vmatpush1.msra.mxu0 0.0
      %993 = vmatprep.subr.mxu0 0.0
      %994 = vmatpush1.msra.mxu0 0.0
      %995 = vmatprep.subr.mxu0 0.0
      %996 = vmatpush1.msra.mxu0 0.0
      %997 = vmatprep.subr.mxu0 0.0
      %998 = vmatpush1.msra.mxu0 0.0
      %999 = vmatprep.subr.mxu0 0.0
      %1000 = vmatpush1.msra.mxu0 0.0
      %1001 = vmatprep.subr.mxu0 0.0
      %1002 = vmatpush1.msra.mxu0 0.0
      %1003 = vmatprep.subr.mxu0 0.0
      %1004 = vmatpush1.msra.mxu0 0.0
      %1005 = vmatprep.subr.mxu0 0.0
      %1006 = vmatpush1.msra.mxu0 0.0
      %1007 = vmatprep.subr.mxu0 0.0
      %1008 = vmatpush1.msra.mxu0 0.0
      %1009 = vmatprep.subr.mxu0 0.0
      %1010 = vmatpush1.msra.mxu0 0.0
      %1011 = vmatprep.subr.mxu0 0.0
      %1012 = vmatpush1.msra.mxu0 0.0
      %1013 = vmatprep.subr.mxu0 0.0
      %1014 = vmatpush1.msra.mxu0 0.0
      %1015 = vmatprep.subr.mxu0 0.0
      %1016 = vmatpush1.msra.mxu0 0.0
      %1017 = vmatprep.subr.mxu0 0.0
      %1018 = vmatpush1.msra.mxu0 0.0
      %1019 = vmatprep.subr.mxu0 0.0
      %1020 = vmatpush1.msra.mxu0 0.0
      %1021 = vmatprep.subr.mxu0 0.0
      %1022 = vmatpush1.msra.mxu0 0.0
      %1023 = vmatprep.subr.mxu0 0.0
      %1024 = vmatpush1.msra.mxu0 0.0
      %1025 = vmatprep.subr.mxu0 0.0
      %1026 = vmatpush1.msra.mxu0 0.0
      %1027 = vmatprep.subr.mxu0 0.0
      %1028 = vmatpush1.msra.mxu0 0.0
      %1029 = vmatprep.subr.mxu0 0.0
      %1030 = vmatpush1.msra.mxu0 0.0
      %1031 = vmatprep.subr.mxu0 0.0
      %1032 = vmatpush1.msra.mxu0 0.0
      %1033 = vmatprep.subr.mxu0 0.0
      %1034 = vmatpush1.msra.mxu0 0.0
      %1035 = vmatprep.subr.mxu0 0.0
      %1036 = vmatpush1.msra.mxu0 0.0
      %1037 = vmatprep.subr.mxu0 0.0
      %1038 = vmatpush1.msra.mxu0 0.0
      %1039 = vmatprep.subr.mxu0 0.0
      %1040 = vmatpush1.msra.mxu0 0.0
      %1041 = vmatprep.mubr.f32.mxu0 0.0
      %1042 = vmatmul.mubr.f32.gmra.mrb[0].mxu0 %v877
      %v1043 = vpop.f32.mrb[0].mxu0
      %v1044 = vadd.f32 %v955, %v1043
      %v1045 = vpop.f32.mrb[0].mxu0
      %v1046 = vadd.f32 %v957, %v1045
      %1047 = vmatprep.mubr.f32.mxu0 0.0
      %1048 = vmatmul.mubr.f32.gmra.mrb[0].mxu0 %v880
      %v1049 = vpop.f32.mrb[0].mxu0
      %v1050 = vadd.f32 %v961, %v1049
      %v1051 = vpop.f32.mrb[0].mxu0
      %v1052 = vadd.f32 %v963, %v1051
      %1053 = vmatprep.mubr.f32.mxu0 0.0
      %1054 = vmatmul.mubr.f32.gmra.mrb[0].mxu0 %v883
      %v1055 = vpop.f32.mrb[0].mxu0
      %v1056 = vadd.f32 %v967, %v1055
      %v1057 = vpop.f32.mrb[0].mxu0
      %v1058 = vadd.f32 %v969, %v1057
      %1059 = vmatprep.mubr.f32.mxu0 0.0
      %1060 = vmatmul.mubr.f32.gmra.mrb[0].mxu0 %v886
      %v1061 = vpop.f32.mrb[0].mxu0
      %v1062 = vadd.f32 %v973, %v1061
      %v1063 = vpop.f32.mrb[0].mxu0
      %v1064 = vadd.f32 %v975, %v1063
      %1065 = vdwg.mxu0
      %v1066 = vmax.f32 %v1044, 0.0
      %v1067 = vmax.f32 %v1046, 0.0
      %v1068 = vmax.f32 %v1050, 0.0
      %v1069 = vmax.f32 %v1052, 0.0
      %v1070 = vmax.f32 %v1056, 0.0
      %v1071 = vmax.f32 %v1058, 0.0
      %v1072 = vmax.f32 %v1062, 0.0
      %v1073 = vmax.f32 %v1064, 0.0
      %v1075 = vsel %vm253, %v241, 0
      %v1078 = vsel %vm253, %v242, 0
      %v1081 = vsel %vm253, %v243, 0
      %v1084 = vsel %vm253, %v244, 0
      %1086 = vmatprep.subr.mxu0 %v1067
      %1087 = vmatpush1.msra.mxu0 %v1066
      %1088 = vmatprep.subr.mxu0 %v1069
      %1089 = vmatpush1.msra.mxu0 %v1068
      %1090 = vmatprep.subr.mxu0 %v1071
      %1091 = vmatpush1.msra.mxu0 %v1070
      %1092 = vmatprep.subr.mxu0 %v1073
      %1093 = vmatpush1.msra.mxu0 %v1072
      %1094 = vmatprep.subr.mxu0 0.0
      %1095 = vmatpush1.msra.mxu0 0.0
      %1096 = vmatprep.subr.mxu0 0.0
      %1097 = vmatpush1.msra.mxu0 0.0
      %1098 = vmatprep.subr.mxu0 0.0
      %1099 = vmatpush1.msra.mxu0 0.0
      %1100 = vmatprep.subr.mxu0 0.0
      %1101 = vmatpush1.msra.mxu0 0.0
      %1102 = vmatprep.subr.mxu0 0.0
      %1103 = vmatpush1.msra.mxu0 0.0
      %1104 = vmatprep.subr.mxu0 0.0
      %1105 = vmatpush1.msra.mxu0 0.0
      %1106 = vmatprep.subr.mxu0 0.0
      %1107 = vmatpush1.msra.mxu0 0.0
      %1108 = vmatprep.subr.mxu0 0.0
      %1109 = vmatpush1.msra.mxu0 0.0
      %1110 = vmatprep.subr.mxu0 0.0
      %1111 = vmatpush1.msra.mxu0 0.0
      %1112 = vmatprep.subr.mxu0 0.0
      %1113 = vmatpush1.msra.mxu0 0.0
      %1114 = vmatprep.subr.mxu0 0.0
      %1115 = vmatpush1.msra.mxu0 0.0
      %1116 = vmatprep.subr.mxu0 0.0
      %1117 = vmatpush1.msra.mxu0 0.0
      %1118 = vmatprep.subr.mxu0 0.0
      %1119 = vmatpush1.msra.mxu0 0.0
      %1120 = vmatprep.subr.mxu0 0.0
      %1121 = vmatpush1.msra.mxu0 0.0
      %1122 = vmatprep.subr.mxu0 0.0
      %1123 = vmatpush1.msra.mxu0 0.0
      %1124 = vmatprep.subr.mxu0 0.0
      %1125 = vmatpush1.msra.mxu0 0.0
      %1126 = vmatprep.subr.mxu0 0.0
      %1127 = vmatpush1.msra.mxu0 0.0
      %1128 = vmatprep.subr.mxu0 0.0
      %1129 = vmatpush1.msra.mxu0 0.0
      %1130 = vmatprep.subr.mxu0 0.0
      %1131 = vmatpush1.msra.mxu0 0.0
      %1132 = vmatprep.subr.mxu0 0.0
      %1133 = vmatpush1.msra.mxu0 0.0
      %1134 = vmatprep.subr.mxu0 0.0
      %1135 = vmatpush1.msra.mxu0 0.0
      %1136 = vmatprep.subr.mxu0 0.0
      %1137 = vmatpush1.msra.mxu0 0.0
      %1138 = vmatprep.subr.mxu0 0.0
      %1139 = vmatpush1.msra.mxu0 0.0
      %1140 = vmatprep.subr.mxu0 0.0
      %1141 = vmatpush1.msra.mxu0 0.0
      %1142 = vmatprep.subr.mxu0 0.0
      %1143 = vmatpush1.msra.mxu0 0.0
      %1144 = vmatprep.subr.mxu0 0.0
      %1145 = vmatpush1.msra.mxu0 0.0
      %1146 = vmatprep.subr.mxu0 0.0
      %1147 = vmatpush1.msra.mxu0 0.0
      %1148 = vmatprep.subr.mxu0 0.0
      %1149 = vmatpush1.msra.mxu0 0.0
      %1150 = vmatprep.mubr.f32.mxu0 0.0
      %1151 = vmatmul.mubr.f32.gmra.mrb[0].mxu0 %v1075
      %v1152 = vpop.f32.mrb[0].mxu0
      %v1153 = vadd.f32 0.0, %v1152
      %v1154 = vpop.f32.mrb[0].mxu0
      %v1155 = vadd.f32 0.0, %v1154
      %1156 = vmatprep.mubr.f32.mxu0 0.0
      %1157 = vmatmul.mubr.f32.gmra.mrb[0].mxu0 %v1078
      %v1158 = vpop.f32.mrb[0].mxu0
      %v1159 = vadd.f32 0.0, %v1158
      %v1160 = vpop.f32.mrb[0].mxu0
      %v1161 = vadd.f32 0.0, %v1160
      %1162 = vmatprep.mubr.f32.mxu0 0.0
      %1163 = vmatmul.mubr.f32.gmra.mrb[0].mxu0 %v1081
      %v1164 = vpop.f32.mrb[0].mxu0
      %v1165 = vadd.f32 0.0, %v1164
      %v1166 = vpop.f32.mrb[0].mxu0
      %v1167 = vadd.f32 0.0, %v1166
      %1168 = vmatprep.mubr.f32.mxu0 0.0
      %1169 = vmatmul.mubr.f32.gmra.mrb[0].mxu0 %v1084
      %v1170 = vpop.f32.mrb[0].mxu0
      %v1171 = vadd.f32 0.0, %v1170
      %v1172 = vpop.f32.mrb[0].mxu0
      %v1173 = vadd.f32 0.0, %v1172
      %1174 = vdwg.mxu0
      %1175 = vst [vmem:[%s224] sm:$0xff] %v1153
      %1176 = vst [vmem:[%s224 + $0x8] sm:$0xff] %v1155
      %1177 = vst [vmem:[%s224 + $0x10] sm:$0xff] %v1159
      %1178 = vst [vmem:[%s224 + $0x18] sm:$0xff] %v1161
      %1179 = vst [vmem:[%s224 + $0x20] sm:$0xff] %v1165
      %1180 = vst [vmem:[%s224 + $0x28] sm:$0xff] %v1167
      %1181 = vst [vmem:[%s224 + $0x30] sm:$0xff] %v1171
      %1182 = vst [vmem:[%s224 + $0x38] sm:$0xff] %v1173
      %p1183 = scmp.lt.s32.totalorder %s16, 1
      %s1184 = scalar_select %p1183, %s16, 1
      %s1185 = smul.addr %s1184, 8
      %s1186 = smul.addr %s1185, 8
      %s1187 = scalar_lea.vmem %s5, %s1186
      // Predicated region
      $region41: #{bottleneck_pallas.1} parent=39 // pred_check
        %p1188 = pneg %p144
      $region42: #{bottleneck_pallas.1} parent=39 // pred_check_branch
        %1190 = sbr.rel (%p1188) target = $region44
      $region43: #{bottleneck_pallas.1} parent=39 // pred_region
        _
      $region44: #{bottleneck_pallas.1} parent=39 // pred_fallthru
        _
    $region40: #{bottleneck_pallas.1} parent=5 // pred_fallthru
      _
    %p1191 = scmp.le.s32.totalorder 2, %s11
    // Predicated region
    $region45: #{bottleneck_pallas.1} parent=5 // pred_check
      %p1192 = pneg %p1191
    $region46: #{bottleneck_pallas.1} parent=5 // pred_check_branch
      %1194 = sbr.rel (%p1192) target = $region48
    $region47: #{bottleneck_pallas.1} parent=5 // pred_region
      %s1195 = ssub.s32 %s11, 2
      // Predicated region
      $region49: #{bottleneck_pallas.1} parent=47 // pred_check
        %p1196 = pneg %p150
      $region50: #{bottleneck_pallas.1} parent=47 // pred_check_branch
        %1198 = sbr.rel (%p1196) target = $region52
      $region51: #{bottleneck_pallas.1} parent=47 // pred_region
        %p1199 = scmp.lt.s32.totalorder %s17, 1
        %s1200 = scalar_select %p1199, %s17, 1
        %s1201 = smul.addr %s1200, 8
        %s1202 = smul.addr %s1201, 8
        %s1203 = scalar_lea.vmem %s5, %s1202
      $region52: #{bottleneck_pallas.1} parent=47 // pred_fallthru
        _
    $region48: #{bottleneck_pallas.1} parent=5 // pred_fallthru
      _
  $region6: #{bottleneck_pallas.1} parent=0 // loop_footer
    %s15 = sadd.s32 1, %s11
  $region7: #{bottleneck_pallas.1} parent=0 // loop_footer_branch
    %10 = sbr.rel target = $region3
  $region8: #{bottleneck_pallas.1} parent=0 // loop_exit
    _

</llo_original>
